<compile_context>
chip_gen: v5e
topology: v5e:2x2
jax: 0.10.0
libtpu: 0.0.40
codegen_flags: <defaults>
</compile_context>

<pallas_src>
import functools

import jax
import jax.numpy as jnp
from jax.experimental import pallas as pl
from jax.experimental.pallas import tpu as pltpu


def _round_up(v, m):
    return ((v + m - 1) // m) * m


def _lowrank_rnn_kernel(h0_ref, x_ref, noise_ref,
                        w1t_ref, w2t_ref, wint_ref, bias_ref,
                        woutt_ref, bout_ref,
                        out_ref, h_ref,
                        *, gamma, rank):
    t = pl.program_id(1)

    # First step of this batch tile: seed the VMEM-resident hidden state.
    @pl.when(t == 0)
    def _():
        h_ref[...] = h0_ref[...]

    h = h_ref[...]                                   # (Bt, Lp) f32, old hidden
    mxu_dtype = woutt_ref.dtype

    # ---- readout of the OLD hidden state: (Bt,Lp)@(Lp,Op) on the MXU ----
    out_ref[0] = (jnp.dot(h.astype(mxu_dtype), woutt_ref[...],
                          preferred_element_type=jnp.float32)
                  + bout_ref[...]).astype(out_ref.dtype)

    # ---- low-rank recurrence ----
    th = jnp.tanh(h)
    low = jnp.dot(th.astype(mxu_dtype), w1t_ref[...],
                  preferred_element_type=jnp.float32)        # (Bt, R)

    if rank <= 8:
        # Rank expansion on the VPU: K=rank would waste almost the whole MXU depth.
        w2 = w2t_ref[...]                                    # (R, Lp) f32
        rec = low[:, 0:1] * w2[0:1, :]
        for r in range(1, rank):
            rec = rec + low[:, r:r + 1] * w2[r:r + 1, :]
    else:
        rec = jnp.dot(low.astype(mxu_dtype), w2t_ref[...].astype(mxu_dtype),
                      preferred_element_type=jnp.float32)    # (Bt, Lp)

    inp = jnp.dot(x_ref[0].astype(mxu_dtype), wint_ref[...],
                  preferred_element_type=jnp.float32)        # (Bt, Lp)

    # f32 epilogue (gamma blend) — new hidden stays resident in VMEM for step t+1.
    h_ref[...] = (1.0 - gamma) * h + gamma * (rec + inp + bias_ref[...]
                                              + noise_ref[0])


def lowrank_rnn_scan(xs, h0, noises, params, *, gamma=0.2,
                     batch_tile=None, mxu_dtype=jnp.bfloat16):
    """Run T LowRankRNN steps in one fused Pallas call.

    xs:     (T, B, input_size)
    h0:     (B, latent_size)
    noises: (T, B, latent_size)   (already scaled by noise_level)
    Returns (outputs (T, B, output_size), h_final (B, latent_size)).
    """
    W1, W2, Win, bias, Wout, bout = params
    T, B, I = xs.shape
    L = h0.shape[1]
    O = Wout.shape[0]
    R = W1.shape[0]

    LANE, SUB = 128, 8
    Lp, Ip, Op = _round_up(L, LANE), _round_up(I, LANE), _round_up(O, LANE)

    # Batch tile: multiple of 8 sublanes, capped at 256 rows (fits v7x's 64 MiB
    # VMEM with double-buffering while staying near the measured roofline knee).
    if batch_tile is None:
        batch_tile = min(_round_up(B, SUB), 256)
    Bt = batch_tile
    Bp = _round_up(B, Bt)
    nb = Bp // Bt

    f32 = jnp.float32
    # Zero-padded, lane-dense activations (f32; cast to bf16 inside the kernel).
    xs_p = jnp.zeros((T, Bp, Ip), f32).at[:, :B, :I].set(xs.astype(f32))
    h0_p = jnp.zeros((Bp, Lp), f32).at[:B, :L].set(h0.astype(f32))
    nz_p = jnp.zeros((T, Bp, Lp), f32).at[:, :B, :L].set(noises.astype(f32))

    # Pre-transposed, zero-padded weights (bf16 for the MXU; biases stay f32).
    w1t = jnp.zeros((Lp, R), mxu_dtype).at[:L, :].set(W1.T.astype(mxu_dtype))
    w2t = jnp.zeros((R, Lp), f32).at[:, :L].set(W2.T.astype(f32))
    wint = jnp.zeros((Ip, Lp), mxu_dtype).at[:I, :L].set(Win.T.astype(mxu_dtype))
    woutt = jnp.zeros((Lp, Op), mxu_dtype).at[:L, :O].set(Wout.T.astype(mxu_dtype))
    bias_p = jnp.zeros((1, Lp), f32).at[:, :L].set(bias.astype(f32)[None])
    bout_p = jnp.zeros((1, Op), f32).at[:, :O].set(bout.astype(f32)[None])

    const = lambda b, t: (0, 0)   # resident block: DMA'd once, never refetched

    outs_p, hfin_p = pl.pallas_call(
        functools.partial(_lowrank_rnn_kernel, gamma=float(gamma), rank=int(R)),
        grid=(nb, T),
        in_specs=[
            pl.BlockSpec((Bt, Lp), lambda b, t: (b, 0)),        # h0 (per b tile)
            pl.BlockSpec((1, Bt, Ip), lambda b, t: (t, b, 0)),  # x_t  (streamed)
            pl.BlockSpec((1, Bt, Lp), lambda b, t: (t, b, 0)),  # noise_t
            pl.BlockSpec((Lp, R), const),                       # W1^T  (resident)
            pl.BlockSpec((R, Lp), const),                       # W2^T  (resident)
            pl.BlockSpec((Ip, Lp), const),                      # Win^T (resident)
            pl.BlockSpec((1, Lp), const),                       # bias  (resident)
            pl.BlockSpec((Lp, Op), const),                      # Wout^T(resident)
            pl.BlockSpec((1, Op), const),                       # bout  (resident)
        ],
        out_specs=(
            pl.BlockSpec((1, Bt, Op), lambda b, t: (t, b, 0)),  # output_t
            pl.BlockSpec((Bt, Lp), lambda b, t: (b, 0)),        # carried hidden
        ),
        out_shape=(
            jax.ShapeDtypeStruct((T, Bp, Op), jnp.float32),
            jax.ShapeDtypeStruct((Bp, Lp), jnp.float32),
        ),
        compiler_params=pltpu.CompilerParams(
            dimension_semantics=("parallel", "arbitrary"),
            vmem_limit_bytes=64 * 1024 * 1024,
        ),
    )(h0_p, xs_p, nz_p, w1t, w2t, wint, bias_p, woutt, bout_p)

    return outs_p[:, :B, :O], hfin_p[:B, :L]


def lowrank_rnn_step(inputs, hidden, noise, params, *, gamma=0.2):
    """Exactly the PyTorch module's forward(): one step -> (output, new_hidden)."""
    outs, hnew = lowrank_rnn_scan(inputs[None], hidden, noise[None], params,
                                  gamma=gamma)
    return outs[0], hnew


def init_params(key, latent_size, rank, input_size, output_size):
    """Deterministic param init mimicking nn.Linear default U(-1/sqrt(fan_in), ...)."""
    ks = jax.random.split(key, 5)

    def lin(k, fan_out, fan_in):
        bound = 1.0 / jnp.sqrt(jnp.float32(fan_in))
        return jax.random.uniform(k, (fan_out, fan_in), jnp.float32, -bound, bound)

    W1 = lin(ks[0], rank, latent_size)           # recW1: latent -> rank
    W2 = lin(ks[1], latent_size, rank)           # recW2: rank -> latent
    Win = lin(ks[2], latent_size, input_size)    # inpW : input -> latent
    bias = jnp.zeros((latent_size,), jnp.float32)
    Wout = lin(ks[3], output_size, latent_size)  # readout weight
    bound = 1.0 / jnp.sqrt(jnp.float32(latent_size))
    bout = jax.random.uniform(ks[4], (output_size,), jnp.float32, -bound, bound)
    return (W1, W2, Win, bias, Wout, bout)


def reference_step(x, h, noise, params, *, gamma=0.2):
    W1, W2, Win, bias, Wout, bout = params
    output = h @ Wout.T + bout
    hnew = (1.0 - gamma) * h + gamma * (
        jnp.tanh(h) @ W1.T @ W2.T + x @ Win.T + bias + noise)
    return output, hnew


def reference_scan(xs, h0, noises, params, *, gamma=0.2):
    def step(h, xn):
        x, n = xn
        out, hnew = reference_step(x, h, n, params, gamma=gamma)
        return hnew, out
    hfin, outs = jax.lax.scan(step, h0, (xs, noises))
    return outs, hfin


if __name__ == "__main__":
    B, latent, rank, in_dim, out_dim, T = 2, 32, 4, 6, 3, 8
    noise_level, gamma = 0.05, 0.2

    key = jax.random.PRNGKey(0)
    k_par, k_h, k_x, k_n = jax.random.split(key, 4)

    params = init_params(k_par, latent, rank, in_dim, out_dim)
    h0 = jax.random.normal(k_h, (B, latent), jnp.float32)
    xs = jax.random.normal(k_x, (T, B, in_dim), jnp.float32)
    # torch.randn_like(hidden) * noise_level  (deterministic host-side noise).
    # TODO(synk): draw the noise in-kernel via pltpu.prng_seed/prng_random_bits
    # to remove the per-step (B, L) HBM noise read.
    noises = jax.random.normal(k_n, (T, B, latent), jnp.float32) * noise_level

    # Fused T-step rollout (one pallas_call).
    outs, hfin = lowrank_rnn_scan(xs, h0, noises, params, gamma=gamma)
    jax.block_until_ready((outs, hfin))

    ref_outs, ref_hfin = reference_scan(xs, h0, noises, params, gamma=gamma)
    assert outs.shape == ref_outs.shape and hfin.shape == ref_hfin.shape
    # bf16 MXU operands with f32 accumulation -> loose-ish tolerance vs f32 ref.
    assert jnp.allclose(outs, ref_outs, atol=5e-2, rtol=5e-2), (
        float(jnp.max(jnp.abs(outs - ref_outs))))
    assert jnp.allclose(hfin, ref_hfin, atol=5e-2, rtol=5e-2), (
        float(jnp.max(jnp.abs(hfin - ref_hfin))))

    # Single-step call matches the module's forward() as well.
    out1, h1 = lowrank_rnn_step(xs[0], h0, noises[0], params, gamma=gamma)
    ref_out1, ref_h1 = reference_step(xs[0], h0, noises[0], params, gamma=gamma)
    assert jnp.allclose(out1, ref_out1, atol=5e-2, rtol=5e-2)
    assert jnp.allclose(h1, ref_h1, atol=5e-2, rtol=5e-2)

    print("KERNEL_OK")
</pallas_src>

<mosaic_0001>
module attributes {stable_mosaic.version = 11 : i64} {
  func.func @_lowrank_rnn_kernel(%arg0: i32, %arg1: i32, %arg2: memref<8x128xf32, #tpu.memory_space<vmem>>, %arg3: memref<1x8x128xf32, #tpu.memory_space<vmem>>, %arg4: memref<1x8x128xf32, #tpu.memory_space<vmem>>, %arg5: memref<128x4xbf16, #tpu.memory_space<vmem>>, %arg6: memref<4x128xf32, #tpu.memory_space<vmem>>, %arg7: memref<128x128xbf16, #tpu.memory_space<vmem>>, %arg8: memref<1x128xf32, #tpu.memory_space<vmem>>, %arg9: memref<128x128xbf16, #tpu.memory_space<vmem>>, %arg10: memref<1x128xf32, #tpu.memory_space<vmem>>, %arg11: memref<1x8x128xf32, #tpu.memory_space<vmem>>, %arg12: memref<8x128xf32, #tpu.memory_space<vmem>>) attributes {dimension_semantics = [#tpu.dimension_semantics<parallel>, #tpu.dimension_semantics<arbitrary>], iteration_bounds = array<i64: 1, 8>, scalar_prefetch = 0 : i64, scratch_operands = 0 : i64, tpu.core_type = #tpu.core_type<tc>, window_params = [{transform_indices = @transform_0, window_bounds = array<i64: 8, 128>}, {transform_indices = @transform_1, window_bounds = array<i64: 1, 8, 128>}, {transform_indices = @transform_2, window_bounds = array<i64: 1, 8, 128>}, {pipeline_mode = #tpu.pipeline_mode<synchronous>, transform_indices = @transform_3, window_bounds = array<i64: 128, 4>}, {pipeline_mode = #tpu.pipeline_mode<synchronous>, transform_indices = @transform_4, window_bounds = array<i64: 4, 128>}, {pipeline_mode = #tpu.pipeline_mode<synchronous>, transform_indices = @transform_5, window_bounds = array<i64: 128, 128>}, {pipeline_mode = #tpu.pipeline_mode<synchronous>, transform_indices = @transform_6, window_bounds = array<i64: 1, 128>}, {pipeline_mode = #tpu.pipeline_mode<synchronous>, transform_indices = @transform_7, window_bounds = array<i64: 128, 128>}, {pipeline_mode = #tpu.pipeline_mode<synchronous>, transform_indices = @transform_8, window_bounds = array<i64: 1, 128>}, {transform_indices = @transform_9, window_bounds = array<i64: 1, 8, 128>}, {transform_indices = @transform_10, window_bounds = array<i64: 8, 128>}]} {
    %c0_i32 = arith.constant 0 : i32
    %0 = arith.cmpi eq, %arg1, %c0_i32 : i32
    %1 = arith.extui %0 : i1 to i32
    %c0_i32_0 = arith.constant 0 : i32
    %2 = arith.cmpi ne, %1, %c0_i32_0 : i32
    scf.if %2 {
      %c0_29 = arith.constant 0 : index
      %c0_30 = arith.constant 0 : index
      %59 = vector.load %arg2[%c0_29, %c0_30] : memref<8x128xf32, #tpu.memory_space<vmem>>, vector<8x128xf32>
      %c0_31 = arith.constant 0 : index
      %c0_32 = arith.constant 0 : index
      %60 = vector.load %arg12[%c0_31, %c0_32] : memref<8x128xf32, #tpu.memory_space<vmem>>, vector<8x128xf32>
      tpu.vector_store %arg12[%c0_31, %c0_32], %59 {strides = array<i32>} : memref<8x128xf32, #tpu.memory_space<vmem>>, vector<8x128xf32>,
    } else {
    }
    %c0 = arith.constant 0 : index
    %c0_1 = arith.constant 0 : index
    %3 = vector.load %arg12[%c0, %c0_1] : memref<8x128xf32, #tpu.memory_space<vmem>>, vector<8x128xf32>
    %4 = arith.truncf %3 : vector<8x128xf32> to vector<8x128xbf16>
    %c0_2 = arith.constant 0 : index
    %c0_3 = arith.constant 0 : index
    %5 = vector.load %arg9[%c0_2, %c0_3] : memref<128x128xbf16, #tpu.memory_space<vmem>>, vector<128x128xbf16>
    %cst = arith.constant dense<0.000000e+00> : vector<8x128xf32>
    %6 = tpu.matmul %4, %5, %cst {dimension_numbers = #tpu.dot_dimension_numbers<[1], [0], [0], [1], [0, 0, 1, 1], [], []>} : vector<8x128xbf16>, vector<128x128xbf16>, vector<8x128xf32> -> vector<8x128xf32>
    %c0_4 = arith.constant 0 : index
    %c0_5 = arith.constant 0 : index
    %7 = vector.load %arg10[%c0_4, %c0_5] : memref<1x128xf32, #tpu.memory_space<vmem>>, vector<1x128xf32>
    %8 = vector.broadcast %7 : vector<1x128xf32> to vector<8x128xf32>
    %9 = arith.addf %6, %8 : vector<8x128xf32>
    %c0_6 = arith.constant 0 : index
    %c0_7 = arith.constant 0 : index
    %c0_8 = arith.constant 0 : index
    %10 = vector.load %arg11[%c0_6, %c0_7, %c0_8] : memref<1x8x128xf32, #tpu.memory_space<vmem>>, vector<1x8x128xf32>
    %11 = vector.shape_cast %10 : vector<1x8x128xf32> to vector<8x128xf32>
    %12 = vector.shape_cast %9 : vector<8x128xf32> to vector<1x8x128xf32>
    tpu.vector_store %arg11[%c0_6, %c0_7, %c0_8], %12 {strides = array<i32>} : memref<1x8x128xf32, #tpu.memory_space<vmem>>, vector<1x8x128xf32>,
    %13 = math.tanh %3 : vector<8x128xf32>
    %14 = arith.truncf %13 : vector<8x128xf32> to vector<8x128xbf16>
    %c0_9 = arith.constant 0 : index
    %c0_10 = arith.constant 0 : index
    %15 = vector.load %arg5[%c0_9, %c0_10] : memref<128x4xbf16, #tpu.memory_space<vmem>>, vector<128x4xbf16>
    %cst_11 = arith.constant dense<0.000000e+00> : vector<8x4xf32>
    %16 = tpu.matmul %14, %15, %cst_11 {dimension_numbers = #tpu.dot_dimension_numbers<[1], [0], [0], [1], [0, 0, 1, 1], [], []>} : vector<8x128xbf16>, vector<128x4xbf16>, vector<8x4xf32> -> vector<8x4xf32>
    %c0_12 = arith.constant 0 : index
    %c0_13 = arith.constant 0 : index
    %17 = vector.load %arg6[%c0_12, %c0_13] : memref<4x128xf32, #tpu.memory_space<vmem>>, vector<4x128xf32>
    %18 = vector.extract_strided_slice %16 {offsets = [0, 0], sizes = [8, 1], strides = [1, 1]} : vector<8x4xf32> to vector<8x1xf32>
    %19 = vector.extract_strided_slice %17 {offsets = [0, 0], sizes = [1, 128], strides = [1, 1]} : vector<4x128xf32> to vector<1x128xf32>
    %20 = vector.broadcast %18 : vector<8x1xf32> to vector<8x128xf32>
    %21 = vector.broadcast %19 : vector<1x128xf32> to vector<8x128xf32>
    %22 = arith.mulf %20, %21 : vector<8x128xf32>
    %23 = vector.extract_strided_slice %16 {offsets = [0, 1], sizes = [8, 1], strides = [1, 1]} : vector<8x4xf32> to vector<8x1xf32>
    %24 = vector.extract_strided_slice %17 {offsets = [1, 0], sizes = [1, 128], strides = [1, 1]} : vector<4x128xf32> to vector<1x128xf32>
    %25 = vector.broadcast %23 : vector<8x1xf32> to vector<8x128xf32>
    %26 = vector.broadcast %24 : vector<1x128xf32> to vector<8x128xf32>
    %27 = arith.mulf %25, %26 : vector<8x128xf32>
    %28 = arith.addf %22, %27 : vector<8x128xf32>
    %29 = vector.extract_strided_slice %16 {offsets = [0, 2], sizes = [8, 1], strides = [1, 1]} : vector<8x4xf32> to vector<8x1xf32>
    %30 = vector.extract_strided_slice %17 {offsets = [2, 0], sizes = [1, 128], strides = [1, 1]} : vector<4x128xf32> to vector<1x128xf32>
    %31 = vector.broadcast %29 : vector<8x1xf32> to vector<8x128xf32>
    %32 = vector.broadcast %30 : vector<1x128xf32> to vector<8x128xf32>
    %33 = arith.mulf %31, %32 : vector<8x128xf32>
    %34 = arith.addf %28, %33 : vector<8x128xf32>
    %35 = vector.extract_strided_slice %16 {offsets = [0, 3], sizes = [8, 1], strides = [1, 1]} : vector<8x4xf32> to vector<8x1xf32>
    %36 = vector.extract_strided_slice %17 {offsets = [3, 0], sizes = [1, 128], strides = [1, 1]} : vector<4x128xf32> to vector<1x128xf32>
    %37 = vector.broadcast %35 : vector<8x1xf32> to vector<8x128xf32>
    %38 = vector.broadcast %36 : vector<1x128xf32> to vector<8x128xf32>
    %39 = arith.mulf %37, %38 : vector<8x128xf32>
    %40 = arith.addf %34, %39 : vector<8x128xf32>
    %c0_14 = arith.constant 0 : index
    %c0_15 = arith.constant 0 : index
    %c0_16 = arith.constant 0 : index
    %41 = vector.load %arg3[%c0_14, %c0_15, %c0_16] : memref<1x8x128xf32, #tpu.memory_space<vmem>>, vector<1x8x128xf32>
    %42 = vector.shape_cast %41 : vector<1x8x128xf32> to vector<8x128xf32>
    %43 = arith.truncf %42 : vector<8x128xf32> to vector<8x128xbf16>
    %c0_17 = arith.constant 0 : index
    %c0_18 = arith.constant 0 : index
    %44 = vector.load %arg7[%c0_17, %c0_18] : memref<128x128xbf16, #tpu.memory_space<vmem>>, vector<128x128xbf16>
    %cst_19 = arith.constant dense<0.000000e+00> : vector<8x128xf32>
    %45 = tpu.matmul %43, %44, %cst_19 {dimension_numbers = #tpu.dot_dimension_numbers<[1], [0], [0], [1], [0, 0, 1, 1], [], []>} : vector<8x128xbf16>, vector<128x128xbf16>, vector<8x128xf32> -> vector<8x128xf32>
    %cst_20 = arith.constant 8.000000e-01 : f32
    %46 = vector.broadcast %cst_20 : f32 to vector<8x128xf32>
    %47 = arith.mulf %46, %3 : vector<8x128xf32>
    %48 = arith.addf %40, %45 : vector<8x128xf32>
    %c0_21 = arith.constant 0 : index
    %c0_22 = arith.constant 0 : index
    %49 = vector.load %arg8[%c0_21, %c0_22] : memref<1x128xf32, #tpu.memory_space<vmem>>, vector<1x128xf32>
    %50 = vector.broadcast %49 : vector<1x128xf32> to vector<8x128xf32>
    %51 = arith.addf %48, %50 : vector<8x128xf32>
    %c0_23 = arith.constant 0 : index
    %c0_24 = arith.constant 0 : index
    %c0_25 = arith.constant 0 : index
    %52 = vector.load %arg4[%c0_23, %c0_24, %c0_25] : memref<1x8x128xf32, #tpu.memory_space<vmem>>, vector<1x8x128xf32>
    %53 = vector.shape_cast %52 : vector<1x8x128xf32> to vector<8x128xf32>
    %54 = arith.addf %51, %53 : vector<8x128xf32>
    %cst_26 = arith.constant 2.000000e-01 : f32
    %55 = vector.broadcast %cst_26 : f32 to vector<8x128xf32>
    %56 = arith.mulf %55, %54 : vector<8x128xf32>
    %57 = arith.addf %47, %56 : vector<8x128xf32>
    %c0_27 = arith.constant 0 : index
    %c0_28 = arith.constant 0 : index
    %58 = vector.load %arg12[%c0_27, %c0_28] : memref<8x128xf32, #tpu.memory_space<vmem>>, vector<8x128xf32>
    tpu.vector_store %arg12[%c0_27, %c0_28], %57 {strides = array<i32>} : memref<8x128xf32, #tpu.memory_space<vmem>>, vector<8x128xf32>,
    return
  }
  func.func @transform_0(%arg0: i32, %arg1: i32) -> (i32, i32) {
    %c0_i32 = arith.constant 0 : i32
    %c0_i32_0 = arith.constant 0 : i32
    return %arg0, %c0_i32 : i32, i32
  }
  func.func @transform_1(%arg0: i32, %arg1: i32) -> (i32, i32, i32) {
    %c0_i32 = arith.constant 0 : i32
    %c0_i32_0 = arith.constant 0 : i32
    return %arg1, %arg0, %c0_i32 : i32, i32, i32
  }
  func.func @transform_2(%arg0: i32, %arg1: i32) -> (i32, i32, i32) {
    %c0_i32 = arith.constant 0 : i32
    %c0_i32_0 = arith.constant 0 : i32
    return %arg1, %arg0, %c0_i32 : i32, i32, i32
  }
  func.func @transform_3(%arg0: i32, %arg1: i32) -> (i32, i32) {
    %c0_i32 = arith.constant 0 : i32
    %c0_i32_0 = arith.constant 0 : i32
    %c0_i32_1 = arith.constant 0 : i32
    return %c0_i32, %c0_i32_0 : i32, i32
  }
  func.func @transform_4(%arg0: i32, %arg1: i32) -> (i32, i32) {
    %c0_i32 = arith.constant 0 : i32
    %c0_i32_0 = arith.constant 0 : i32
    %c0_i32_1 = arith.constant 0 : i32
    return %c0_i32, %c0_i32_0 : i32, i32
  }
  func.func @transform_5(%arg0: i32, %arg1: i32) -> (i32, i32) {
    %c0_i32 = arith.constant 0 : i32
    %c0_i32_0 = arith.constant 0 : i32
    %c0_i32_1 = arith.constant 0 : i32
    return %c0_i32, %c0_i32_0 : i32, i32
  }
  func.func @transform_6(%arg0: i32, %arg1: i32) -> (i32, i32) {
    %c0_i32 = arith.constant 0 : i32
    %c0_i32_0 = arith.constant 0 : i32
    %c0_i32_1 = arith.constant 0 : i32
    return %c0_i32, %c0_i32_0 : i32, i32
  }
  func.func @transform_7(%arg0: i32, %arg1: i32) -> (i32, i32) {
    %c0_i32 = arith.constant 0 : i32
    %c0_i32_0 = arith.constant 0 : i32
    %c0_i32_1 = arith.constant 0 : i32
    return %c0_i32, %c0_i32_0 : i32, i32
  }
  func.func @transform_8(%arg0: i32, %arg1: i32) -> (i32, i32) {
    %c0_i32 = arith.constant 0 : i32
    %c0_i32_0 = arith.constant 0 : i32
    %c0_i32_1 = arith.constant 0 : i32
    return %c0_i32, %c0_i32_0 : i32, i32
  }
  func.func @transform_9(%arg0: i32, %arg1: i32) -> (i32, i32, i32) {
    %c0_i32 = arith.constant 0 : i32
    %c0_i32_0 = arith.constant 0 : i32
    return %arg1, %arg0, %c0_i32 : i32, i32, i32
  }
  func.func @transform_10(%arg0: i32, %arg1: i32) -> (i32, i32) {
    %c0_i32 = arith.constant 0 : i32
    %c0_i32_0 = arith.constant 0 : i32
    return %arg0, %c0_i32 : i32, i32
  }
}

</mosaic_0001>

<llo_original>
// kernel: tpu_custom_call.1
$region0: #{tpu_custom_call.1}
  #allocation0 [shape = 'u32[]', space=smem, size = 0x4, offset = 0x4, fixed_abs, tag = 'smem constant byte address 0x4 - core index']
  #allocation1 [shape = 'u32[72,128]{1,0:T(1,128)}', space=vmem, size = 0x9000, scoped, tag = 'internal scratch']
  %s0 = inlined_call_operand.hbm [shape: f32[8,128], index: 0, kind: input, shape index: {}]
  %s1 = inlined_call_operand.vmem [shape: f32[8,8,128], index: 1, kind: input, shape index: {}]
  %s2 = inlined_call_operand.hbm [shape: f32[8,8,128], index: 2, kind: input, shape index: {}]
  %s3 = inlined_call_operand.vmem [shape: bf16[128,4], index: 3, kind: input, shape index: {}]
  %s4 = inlined_call_operand.hbm [shape: f32[4,128], index: 4, kind: input, shape index: {}]
  %s5 = inlined_call_operand.hbm [shape: bf16[128,128], index: 5, kind: input, shape index: {}]
  %s6 = inlined_call_operand.vmem [shape: f32[1,128], index: 6, kind: input, shape index: {}]
  %s7 = inlined_call_operand.hbm [shape: bf16[128,128], index: 7, kind: input, shape index: {}]
  %s8 = inlined_call_operand.vmem [shape: f32[1,128], index: 8, kind: input, shape index: {}]
  %s9 = inlined_call_operand.hbm [shape: f32[8,8,128], index: 9, kind: output, shape index: {0}]
  %s10 = inlined_call_operand.hbm [shape: f32[8,128], index: 10, kind: output, shape index: {1}]
  %11 = xla_tuple %s9, %s10
  %s12 = sld [smem:[#allocation0]]
  $region101: #{tpu_custom_call.1} parent=0
    _
  %s14 = ssub.s32 1, %s12
  %s15 = scalar_select 0, %s14, %s12
  $region1: #{tpu_custom_call.1} parent=0
    #allocation2 [shape = 'u8[4096]{0}', space=vmem, size = 0x1000, scoped, tag = 'input window, operand 0, single buffered']
    #allocation3 [shape = 's32[2]{0}', space=sflag, size = 0x8, scoped, tag = 'scoped memory for tpu_custom_call.1']
    #allocation4 [shape = 's32[2]{0}', space=sflag, size = 0x8, scoped, tag = 'scoped memory for tpu_custom_call.1']
    #allocation5 [shape = 'u8[8192]{0}', space=vmem, size = 0x2000, scoped, tag = 'input window, operand 2']
    #allocation6 [shape = 's32[2]{0}', space=sflag, size = 0x8, scoped, tag = 'scoped memory for tpu_custom_call.1']
    #allocation7 [shape = 'u8[2048]{0}', space=vmem, size = 0x800, scoped, tag = 'input window, operand 4, single buffered']
    #allocation8 [shape = 'u8[32768]{0}', space=vmem, size = 0x8000, scoped, tag = 'input window, operand 5, single buffered']
    #allocation9 [shape = 's32[1]{0}', space=sflag, size = 0x4, scoped, tag = 'scoped memory for tpu_custom_call.1']
    #allocation10 [shape = 'u8[32768]{0}', space=vmem, size = 0x8000, scoped, tag = 'input window, operand 7, single buffered']
    #allocation11 [shape = 'u8[8192]{0}', space=vmem, size = 0x2000, scoped, tag = 'output window, operand 0']
    #allocation12 [shape = 'u8[4096]{0}', space=vmem, size = 0x1000, scoped, tag = 'output window, operand 1, single buffered']
    #allocation13 [shape = 's32[1]{0}', space=sflag, size = 0x4, scoped, tag = 'scoped memory for tpu_custom_call.1']
    %16 = vsyncpa [#allocation3], 0
    %17 = vsyncpa [#allocation6], 0
    %s18 = scalar_lea.sflag [#allocation6], 1
    %19 = vsyncpa %s18, 0
    %20 = vsyncpa [#allocation9], 0
    %21 = vsyncpa [#allocation4], 0
    %s22 = scalar_lea.sflag [#allocation4], 1
    %23 = vsyncpa %s22, 0
    %24 = vsyncpa [#allocation13], 0
    loop: start=0, step=1, limit=10
    $region2: #{tpu_custom_call.1} parent=1 // loop_pre_header
      _
    $region3: #{tpu_custom_call.1} parent=1 // loop_header
      %s26 = sphi 0, %s30
      %p27 = scmp.ge.s32.totalorder %s26, 10
      %s33 = sphi 0, %s45
      %s34 = sphi 0, %s41
      %s35 = sphi 0, %s33
      %s36 = sphi 0, %s34
      %s37 = sphi 0, %s35
      %s38 = sphi 0, %s36
      %s48 = sphi 0, %s50
      %s51 = sphi 0, %s48
      %s52 = sphi 0, %s51
      %s68 = sphi 0, %s52
      %s76 = sphi 0, %s78
      %s79 = sphi 0, %s76
      %s80 = sphi 0, %s79
      %s96 = sphi 0, %s80
      %s104 = sphi 0, %s106
      %s107 = sphi 0, %s104
      %s108 = sphi 0, %s107
      %s124 = sphi 0, %s108
      %s128 = sphi 0, %s128
      %s130 = sphi 0, %s128
      %s131 = sphi 0, %s130
      %s145 = sphi 0, %s131
      %s149 = sphi 0, %s149
      %s151 = sphi 0, %s149
      %s152 = sphi 0, %s151
      %s166 = sphi 0, %s152
      %s170 = sphi 0, %s170
      %s172 = sphi 0, %s170
      %s173 = sphi 0, %s172
      %s187 = sphi 0, %s173
      %s191 = sphi 0, %s191
      %s193 = sphi 0, %s191
      %s194 = sphi 0, %s193
      %s208 = sphi 0, %s194
      %s212 = sphi 0, %s212
      %s214 = sphi 0, %s212
      %s215 = sphi 0, %s214
      %s229 = sphi 0, %s215
      %s233 = sphi 0, %s233
      %s235 = sphi 0, %s233
      %s236 = sphi 0, %s235
      %s250 = sphi 0, %s236
      %s258 = sphi 0, %s260
      %s261 = sphi 0, %s258
      %s262 = sphi 0, %s261
      %s278 = sphi 0, %s262
      %s284 = sphi 0, %s286
      %s287 = sphi 0, %s284
      %s288 = sphi 0, %s287
      %s304 = sphi 0, %s288
    $region4: #{tpu_custom_call.1} parent=1 // loop_header_branch
      %29 = sbr.rel (%p27) target = $region8
    $region5: #{tpu_custom_call.1} parent=1 // loop_body
      %s31 = ssub.s32 %s26, 1
      %s32 = ssub.s32 %s26, 2
      %s39 = sadd.s32 1, %s34
      %p40 = scmp.ge.s32.totalorder %s39, 8
      %s41 = scalar_select %p40, 0, %s39
      %s42 = sadd.s32 1, %s33
      %s43 = scalar_select %p40, %s42, %s33
      %p44 = scmp.ge.s32.totalorder %s43, 1
      %s45 = scalar_select %p44, 0, %s43
      %s46 = ssub.s32 %s33, %s45
      %p47 = scmp.eq.s32.totalorder %s46, 0
      %s49 = sadd.s32 %s48, 1
      %s50 = scalar_select %p47, %s48, %s49
      %p53 = pneg %p47
      %p54 = scmp.eq.s32.totalorder %s26, 7
      %p55 = por %p53, %p54
      %p56 = scmp.ne.s32.totalorder %s48, %s51
      %p57 = scmp.eq.s32.totalorder %s26, 0
      %p58 = por %p56, %p57
      %p59 = scmp.ne.s32.totalorder %s48, %s51
      %p60 = scmp.eq.s32.totalorder %s31, 7
      %p61 = por %p59, %p60
      %p62 = scmp.ne.s32.totalorder %s51, %s52
      %p63 = scmp.eq.s32.totalorder %s31, 0
      %p64 = por %p62, %p63
      %p65 = scmp.ne.s32.totalorder %s51, %s52
      %p66 = scmp.eq.s32.totalorder %s32, 7
      %p67 = por %p65, %p66
      %p69 = scmp.ne.s32.totalorder %s52, %s68
      %p70 = scmp.eq.s32.totalorder %s32, 0
      %p71 = por %p69, %p70
      %s72 = ssub.s32 %s34, %s41
      %s73 = ssub.s32 %s33, %s45
      %s74 = sor.u32 %s72, %s73
      %p75 = scmp.eq.s32.totalorder %s74, 0
      %s77 = sadd.s32 %s76, 1
      %s78 = scalar_select %p75, %s76, %s77
      %p81 = pneg %p75
      %p82 = scmp.eq.s32.totalorder %s26, 7
      %p83 = por %p81, %p82
      %p84 = scmp.ne.s32.totalorder %s76, %s79
      %p85 = scmp.eq.s32.totalorder %s26, 0
      %p86 = por %p84, %p85
      %p87 = scmp.ne.s32.totalorder %s76, %s79
      %p88 = scmp.eq.s32.totalorder %s31, 7
      %p89 = por %p87, %p88
      %p90 = scmp.ne.s32.totalorder %s79, %s80
      %p91 = scmp.eq.s32.totalorder %s31, 0
      %p92 = por %p90, %p91
      %p93 = scmp.ne.s32.totalorder %s79, %s80
      %p94 = scmp.eq.s32.totalorder %s32, 7
      %p95 = por %p93, %p94
      %p97 = scmp.ne.s32.totalorder %s80, %s96
      %p98 = scmp.eq.s32.totalorder %s32, 0
      %p99 = por %p97, %p98
      %s100 = ssub.s32 %s34, %s41
      %s101 = ssub.s32 %s33, %s45
      %s102 = sor.u32 %s100, %s101
      %p103 = scmp.eq.s32.totalorder %s102, 0
      %s105 = sadd.s32 %s104, 1
      %s106 = scalar_select %p103, %s104, %s105
      %p109 = pneg %p103
      %p110 = scmp.eq.s32.totalorder %s26, 7
      %p111 = por %p109, %p110
      %p112 = scmp.ne.s32.totalorder %s104, %s107
      %p113 = scmp.eq.s32.totalorder %s26, 0
      %p114 = por %p112, %p113
      %p115 = scmp.ne.s32.totalorder %s104, %s107
      %p116 = scmp.eq.s32.totalorder %s31, 7
      %p117 = por %p115, %p116
      %p118 = scmp.ne.s32.totalorder %s107, %s108
      %p119 = scmp.eq.s32.totalorder %s31, 0
      %p120 = por %p118, %p119
      %p121 = scmp.ne.s32.totalorder %s107, %s108
      %p122 = scmp.eq.s32.totalorder %s32, 7
      %p123 = por %p121, %p122
      %p125 = scmp.ne.s32.totalorder %s108, %s124
      %p126 = scmp.eq.s32.totalorder %s32, 0
      %p127 = por %p125, %p126
      %s129 = sadd.s32 %s128, 1
      %p132 = scmp.eq.s32.totalorder %s26, 7
      %p133 = scmp.ne.s32.totalorder %s128, %s130
      %p134 = scmp.eq.s32.totalorder %s26, 0
      %p135 = por %p133, %p134
      %p136 = scmp.ne.s32.totalorder %s128, %s130
      %p137 = scmp.eq.s32.totalorder %s31, 7
      %p138 = por %p136, %p137
      %p139 = scmp.ne.s32.totalorder %s130, %s131
      %p140 = scmp.eq.s32.totalorder %s31, 0
      %p141 = por %p139, %p140
      %p142 = scmp.ne.s32.totalorder %s130, %s131
      %p143 = scmp.eq.s32.totalorder %s32, 7
      %p144 = por %p142, %p143
      %p146 = scmp.ne.s32.totalorder %s131, %s145
      %p147 = scmp.eq.s32.totalorder %s32, 0
      %p148 = por %p146, %p147
      %s150 = sadd.s32 %s149, 1
      %p153 = scmp.eq.s32.totalorder %s26, 7
      %p154 = scmp.ne.s32.totalorder %s149, %s151
      %p155 = scmp.eq.s32.totalorder %s26, 0
      %p156 = por %p154, %p155
      %p157 = scmp.ne.s32.totalorder %s149, %s151
      %p158 = scmp.eq.s32.totalorder %s31, 7
      %p159 = por %p157, %p158
      %p160 = scmp.ne.s32.totalorder %s151, %s152
      %p161 = scmp.eq.s32.totalorder %s31, 0
      %p162 = por %p160, %p161
      %p163 = scmp.ne.s32.totalorder %s151, %s152
      %p164 = scmp.eq.s32.totalorder %s32, 7
      %p165 = por %p163, %p164
      %p167 = scmp.ne.s32.totalorder %s152, %s166
      %p168 = scmp.eq.s32.totalorder %s32, 0
      %p169 = por %p167, %p168
      %s171 = sadd.s32 %s170, 1
      %p174 = scmp.eq.s32.totalorder %s26, 7
      %p175 = scmp.ne.s32.totalorder %s170, %s172
      %p176 = scmp.eq.s32.totalorder %s26, 0
      %p177 = por %p175, %p176
      %p178 = scmp.ne.s32.totalorder %s170, %s172
      %p179 = scmp.eq.s32.totalorder %s31, 7
      %p180 = por %p178, %p179
      %p181 = scmp.ne.s32.totalorder %s172, %s173
      %p182 = scmp.eq.s32.totalorder %s31, 0
      %p183 = por %p181, %p182
      %p184 = scmp.ne.s32.totalorder %s172, %s173
      %p185 = scmp.eq.s32.totalorder %s32, 7
      %p186 = por %p184, %p185
      %p188 = scmp.ne.s32.totalorder %s173, %s187
      %p189 = scmp.eq.s32.totalorder %s32, 0
      %p190 = por %p188, %p189
      %s192 = sadd.s32 %s191, 1
      %p195 = scmp.eq.s32.totalorder %s26, 7
      %p196 = scmp.ne.s32.totalorder %s191, %s193
      %p197 = scmp.eq.s32.totalorder %s26, 0
      %p198 = por %p196, %p197
      %p199 = scmp.ne.s32.totalorder %s191, %s193
      %p200 = scmp.eq.s32.totalorder %s31, 7
      %p201 = por %p199, %p200
      %p202 = scmp.ne.s32.totalorder %s193, %s194
      %p203 = scmp.eq.s32.totalorder %s31, 0
      %p204 = por %p202, %p203
      %p205 = scmp.ne.s32.totalorder %s193, %s194
      %p206 = scmp.eq.s32.totalorder %s32, 7
      %p207 = por %p205, %p206
      %p209 = scmp.ne.s32.totalorder %s194, %s208
      %p210 = scmp.eq.s32.totalorder %s32, 0
      %p211 = por %p209, %p210
      %s213 = sadd.s32 %s212, 1
      %p216 = scmp.eq.s32.totalorder %s26, 7
      %p217 = scmp.ne.s32.totalorder %s212, %s214
      %p218 = scmp.eq.s32.totalorder %s26, 0
      %p219 = por %p217, %p218
      %p220 = scmp.ne.s32.totalorder %s212, %s214
      %p221 = scmp.eq.s32.totalorder %s31, 7
      %p222 = por %p220, %p221
      %p223 = scmp.ne.s32.totalorder %s214, %s215
      %p224 = scmp.eq.s32.totalorder %s31, 0
      %p225 = por %p223, %p224
      %p226 = scmp.ne.s32.totalorder %s214, %s215
      %p227 = scmp.eq.s32.totalorder %s32, 7
      %p228 = por %p226, %p227
      %p230 = scmp.ne.s32.totalorder %s215, %s229
      %p231 = scmp.eq.s32.totalorder %s32, 0
      %p232 = por %p230, %p231
      %s234 = sadd.s32 %s233, 1
      %p237 = scmp.eq.s32.totalorder %s26, 7
      %p238 = scmp.ne.s32.totalorder %s233, %s235
      %p239 = scmp.eq.s32.totalorder %s26, 0
      %p240 = por %p238, %p239
      %p241 = scmp.ne.s32.totalorder %s233, %s235
      %p242 = scmp.eq.s32.totalorder %s31, 7
      %p243 = por %p241, %p242
      %p244 = scmp.ne.s32.totalorder %s235, %s236
      %p245 = scmp.eq.s32.totalorder %s31, 0
      %p246 = por %p244, %p245
      %p247 = scmp.ne.s32.totalorder %s235, %s236
      %p248 = scmp.eq.s32.totalorder %s32, 7
      %p249 = por %p247, %p248
      %p251 = scmp.ne.s32.totalorder %s236, %s250
      %p252 = scmp.eq.s32.totalorder %s32, 0
      %p253 = por %p251, %p252
      %s254 = ssub.s32 %s34, %s41
      %s255 = ssub.s32 %s33, %s45
      %s256 = sor.u32 %s254, %s255
      %p257 = scmp.eq.s32.totalorder %s256, 0
      %s259 = sadd.s32 %s258, 1
      %s260 = scalar_select %p257, %s258, %s259
      %p263 = pneg %p257
      %p264 = scmp.eq.s32.totalorder %s26, 7
      %p265 = por %p263, %p264
      %p266 = scmp.ne.s32.totalorder %s258, %s261
      %p267 = scmp.eq.s32.totalorder %s26, 0
      %p268 = por %p266, %p267
      %p269 = scmp.ne.s32.totalorder %s258, %s261
      %p270 = scmp.eq.s32.totalorder %s31, 7
      %p271 = por %p269, %p270
      %p272 = scmp.ne.s32.totalorder %s261, %s262
      %p273 = scmp.eq.s32.totalorder %s31, 0
      %p274 = por %p272, %p273
      %p275 = scmp.ne.s32.totalorder %s261, %s262
      %p276 = scmp.eq.s32.totalorder %s32, 7
      %p277 = por %p275, %p276
      %p279 = scmp.ne.s32.totalorder %s262, %s278
      %p280 = scmp.eq.s32.totalorder %s32, 0
      %p281 = por %p279, %p280
      %s282 = ssub.s32 %s33, %s45
      %p283 = scmp.eq.s32.totalorder %s282, 0
      %s285 = sadd.s32 %s284, 1
      %s286 = scalar_select %p283, %s284, %s285
      %p289 = pneg %p283
      %p290 = scmp.eq.s32.totalorder %s26, 7
      %p291 = por %p289, %p290
      %p292 = scmp.ne.s32.totalorder %s284, %s287
      %p293 = scmp.eq.s32.totalorder %s26, 0
      %p294 = por %p292, %p293
      %p295 = scmp.ne.s32.totalorder %s284, %s287
      %p296 = scmp.eq.s32.totalorder %s31, 7
      %p297 = por %p295, %p296
      %p298 = scmp.ne.s32.totalorder %s287, %s288
      %p299 = scmp.eq.s32.totalorder %s31, 0
      %p300 = por %p298, %p299
      %p301 = scmp.ne.s32.totalorder %s287, %s288
      %p302 = scmp.eq.s32.totalorder %s32, 7
      %p303 = por %p301, %p302
      %p305 = scmp.ne.s32.totalorder %s288, %s304
      %p306 = scmp.eq.s32.totalorder %s32, 0
      %p307 = por %p305, %p306
      %p308 = scmp.le.s32.totalorder 1, %s26
      %p309 = scmp.lt.s32.totalorder %s26, 9
      %p310 = pnand %p308, %p309
      %p311 = pneg %p310
      // Predicated region
      $region9: #{tpu_custom_call.1} parent=5 // pred_check
        _
      $region10: #{tpu_custom_call.1} parent=5 // pred_check_branch
        %313 = sbr.rel (%p310) target = $region12
      $region11: #{tpu_custom_call.1} parent=5 // pred_region
        %s314 = ssub.s32 %s26, 1
        // Predicated region
        $region13: #{tpu_custom_call.1} parent=11 // pred_check
          %p315 = pneg %p64
        $region14: #{tpu_custom_call.1} parent=11 // pred_check_branch
          %317 = sbr.rel (%p315) target = $region16
        $region15: #{tpu_custom_call.1} parent=11 // pred_region
          %319 = vsyncadd [#allocation3], 0
          %s320 = smul.addr %s35, 8
          %s321 = scalar_lea.hbm %s0, %s320
          %s323 = sshll.u32 %s321, 4
          %s324 = int_to_ptr.hbm [resolvable:$true] %s323
          %s325 = sshll.u32 [#allocation2], 4
          %s326 = int_to_ptr.vmem [resolvable:$true] %s325
          %328 = dma.hbm_to_vmem [thread:$0]  %s324, 128, %s326, [#allocation3]
        $region16: #{tpu_custom_call.1} parent=11 // pred_fallthru
          _
        // Predicated region
        $region17: #{tpu_custom_call.1} parent=11 // pred_check
          %p329 = pneg %p141
        $region18: #{tpu_custom_call.1} parent=11 // pred_check_branch
          %331 = sbr.rel (%p329) target = $region20
        $region19: #{tpu_custom_call.1} parent=11 // pred_region
          _
        $region20: #{tpu_custom_call.1} parent=11 // pred_fallthru
          _
        // Predicated region
        $region21: #{tpu_custom_call.1} parent=11 // pred_check
          %p332 = pneg %p162
        $region22: #{tpu_custom_call.1} parent=11 // pred_check_branch
          %334 = sbr.rel (%p332) target = $region24
        $region23: #{tpu_custom_call.1} parent=11 // pred_region
          %336 = vsyncadd [#allocation6], 0
          %s338 = sshll.u32 %s4, 4
          %s339 = int_to_ptr.hbm [resolvable:$true] %s338
          %s340 = sshll.u32 [#allocation7], 4
          %s341 = int_to_ptr.vmem [resolvable:$true] %s340
          %343 = dma.hbm_to_vmem [thread:$0]  %s339, 64, %s341, [#allocation6]
        $region24: #{tpu_custom_call.1} parent=11 // pred_fallthru
          _
        // Predicated region
        $region25: #{tpu_custom_call.1} parent=11 // pred_check
          %p344 = pneg %p183
        $region26: #{tpu_custom_call.1} parent=11 // pred_check_branch
          %346 = sbr.rel (%p344) target = $region28
        $region27: #{tpu_custom_call.1} parent=11 // pred_region
          %348 = vsyncadd [#allocation9], 0
          %s349 = sshll.u32 %s5, 4
          %s350 = int_to_ptr.hbm [resolvable:$true] %s349
          %s351 = sshll.u32 [#allocation8], 4
          %s352 = int_to_ptr.vmem [resolvable:$true] %s351
          %357 = dma.hbm_to_vmem [thread:$0]  %s350, 1024, %s352, [#allocation9], 64, 64, 4
        $region28: #{tpu_custom_call.1} parent=11 // pred_fallthru
          _
        // Predicated region
        $region29: #{tpu_custom_call.1} parent=11 // pred_check
          %p358 = pneg %p204
        $region30: #{tpu_custom_call.1} parent=11 // pred_check_branch
          %360 = sbr.rel (%p358) target = $region32
        $region31: #{tpu_custom_call.1} parent=11 // pred_region
          _
        $region32: #{tpu_custom_call.1} parent=11 // pred_fallthru
          _
        // Predicated region
        $region33: #{tpu_custom_call.1} parent=11 // pred_check
          %p361 = pneg %p225
        $region34: #{tpu_custom_call.1} parent=11 // pred_check_branch
          %363 = sbr.rel (%p361) target = $region36
        $region35: #{tpu_custom_call.1} parent=11 // pred_region
          %365 = vsyncadd [#allocation9], 0
          %s366 = sshll.u32 %s7, 4
          %s367 = int_to_ptr.hbm [resolvable:$true] %s366
          %s368 = sshll.u32 [#allocation10], 4
          %s369 = int_to_ptr.vmem [resolvable:$true] %s368
          %374 = dma.hbm_to_vmem [thread:$0]  %s367, 1024, %s369, [#allocation9], 64, 64, 4
        $region36: #{tpu_custom_call.1} parent=11 // pred_fallthru
          _
        // Predicated region
        $region37: #{tpu_custom_call.1} parent=11 // pred_check
          %p375 = pneg %p246
        $region38: #{tpu_custom_call.1} parent=11 // pred_check_branch
          %377 = sbr.rel (%p375) target = $region40
        $region39: #{tpu_custom_call.1} parent=11 // pred_region
          _
        $region40: #{tpu_custom_call.1} parent=11 // pred_fallthru
          _
      $region12: #{tpu_custom_call.1} parent=5 // pred_fallthru
        _
      %p378 = scmp.lt.s32.totalorder %s26, 8
      // Predicated region
      $region41: #{tpu_custom_call.1} parent=5 // pred_check
        %p379 = pneg %p378
      $region42: #{tpu_custom_call.1} parent=5 // pred_check_branch
        %381 = sbr.rel (%p379) target = $region44
      $region43: #{tpu_custom_call.1} parent=5 // pred_region
        // Predicated region
        $region45: #{tpu_custom_call.1} parent=43 // pred_check
          %p382 = pneg %p86
        $region46: #{tpu_custom_call.1} parent=43 // pred_check_branch
          %384 = sbr.rel (%p382) target = $region48
        $region47: #{tpu_custom_call.1} parent=43 // pred_region
          %p385 = scmp.lt.s32.totalorder %s34, 7
          %s386 = scalar_select %p385, %s34, 7
          %p387 = scmp.lt.s32.totalorder %s33, 0
          %s388 = scalar_select %p387, %s33, 0
          %s389 = sadd.s32 %s388, %s386
          %s390 = smul.addr %s389, 8
          %s391 = scalar_lea.vmem %s1, %s390
        $region48: #{tpu_custom_call.1} parent=43 // pred_fallthru
          _
        // Predicated region
        $region49: #{tpu_custom_call.1} parent=43 // pred_check
          %p392 = pneg %p114
        $region50: #{tpu_custom_call.1} parent=43 // pred_check_branch
          %394 = sbr.rel (%p392) target = $region52
        $region51: #{tpu_custom_call.1} parent=43 // pred_region
          %s395 = sand.u32 %s26, 1
          %s396 = scalar_lea.sflag [#allocation6], %s395
          %s397 = sand.u32 %s104, 1
          %s398 = smul.addr %s397, 8
          %s399 = scalar_lea.vmem [#allocation5], %s398
          %401 = vsyncadd %s396, 0
          %s402 = sadd.s32 %s33, %s34
          %s403 = smul.addr %s402, 8
          %s404 = scalar_lea.hbm %s2, %s403
          %s406 = sshll.u32 %s404, 4
          %s407 = int_to_ptr.hbm [resolvable:$true] %s406
          %s408 = sshll.u32 %s399, 4
          %s409 = int_to_ptr.vmem [resolvable:$true] %s408
          %411 = dma.hbm_to_vmem [thread:$0]  %s407, 128, %s409, %s396
        $region52: #{tpu_custom_call.1} parent=43 // pred_fallthru
          _
      $region44: #{tpu_custom_call.1} parent=5 // pred_fallthru
        _
      %p412 = scmp.le.s32.totalorder 1, %s26
      %p413 = scmp.lt.s32.totalorder %s26, 9
      %p414 = pnand %p412, %p413
      %p415 = pneg %p414
      // Predicated region
      $region53: #{tpu_custom_call.1} parent=5 // pred_check
        _
      $region54: #{tpu_custom_call.1} parent=5 // pred_check_branch
        %417 = sbr.rel (%p414) target = $region56
      $region55: #{tpu_custom_call.1} parent=5 // pred_region
        %s418 = ssub.s32 %s26, 1
        // Predicated region
        $region57: #{tpu_custom_call.1} parent=55 // pred_check
          %p419 = pneg %p64
        $region58: #{tpu_custom_call.1} parent=55 // pred_check_branch
          %421 = sbr.rel (%p419) target = $region60
        $region59: #{tpu_custom_call.1} parent=55 // pred_region
          %423 = dma.done [#allocation3], 128
        $region60: #{tpu_custom_call.1} parent=55 // pred_fallthru
          _
        %s424 = sand.u32 %s31, 1
        %s425 = scalar_lea.sflag [#allocation6], %s424
        %s426 = sand.u32 %s107, 1
        %s427 = smul.addr %s426, 8
        %s428 = scalar_lea.vmem [#allocation5], %s427
        // Predicated region
        $region61: #{tpu_custom_call.1} parent=55 // pred_check
          %p429 = pneg %p120
        $region62: #{tpu_custom_call.1} parent=55 // pred_check_branch
          %431 = sbr.rel (%p429) target = $region64
        $region63: #{tpu_custom_call.1} parent=55 // pred_region
          %433 = dma.done %s425, 128
        $region64: #{tpu_custom_call.1} parent=55 // pred_fallthru
          _
        // Predicated region
        $region65: #{tpu_custom_call.1} parent=55 // pred_check
          %p434 = pneg %p162
        $region66: #{tpu_custom_call.1} parent=55 // pred_check_branch
          %436 = sbr.rel (%p434) target = $region68
        $region67: #{tpu_custom_call.1} parent=55 // pred_region
          %438 = dma.done [#allocation6], 64
        $region68: #{tpu_custom_call.1} parent=55 // pred_fallthru
          _
        // Predicated region
        $region69: #{tpu_custom_call.1} parent=55 // pred_check
          %p439 = pneg %p183
        $region70: #{tpu_custom_call.1} parent=55 // pred_check_branch
          %441 = sbr.rel (%p439) target = $region72
        $region71: #{tpu_custom_call.1} parent=55 // pred_region
          %443 = dma.done [#allocation9], 1024
        $region72: #{tpu_custom_call.1} parent=55 // pred_fallthru
          _
        // Predicated region
        $region73: #{tpu_custom_call.1} parent=55 // pred_check
          %p444 = pneg %p225
        $region74: #{tpu_custom_call.1} parent=55 // pred_check_branch
          %446 = sbr.rel (%p444) target = $region76
        $region75: #{tpu_custom_call.1} parent=55 // pred_region
          %448 = dma.done [#allocation9], 1024
        $region76: #{tpu_custom_call.1} parent=55 // pred_fallthru
          _
        %p449 = pneg %p64
        %p450 = pneg %p61
        %p451 = scmp.lt.s32.totalorder %s36, 7
        %s452 = scalar_select %p451, %s36, 7
        %p453 = scmp.lt.s32.totalorder %s35, 0
        %s454 = scalar_select %p453, %s35, 0
        %s455 = sadd.s32 %s454, %s452
        %s456 = smul.addr %s455, 8
        %s457 = scalar_lea.vmem %s1, %s456
        %p458 = pneg %p92
        %p459 = pneg %p89
        %s460 = sand.u32 %s31, 1
        %s461 = scalar_lea.sflag [#allocation6], %s460
        %s462 = sand.u32 %s107, 1
        %s463 = smul.addr %s462, 8
        %s464 = scalar_lea.vmem [#allocation5], %s463
        %p465 = pneg %p120
        %p466 = pneg %p117
        %p467 = pneg %p141
        %p468 = pneg %p138
        %p469 = pneg %p162
        %p470 = pneg %p159
        %p471 = pneg %p183
        %p472 = pneg %p180
        %p473 = pneg %p204
        %p474 = pneg %p201
        %p475 = pneg %p225
        %p476 = pneg %p222
        %p477 = pneg %p246
        %p478 = pneg %p243
        %p479 = pneg %p274
        %p480 = pneg %p271
        %s481 = sand.u32 %s261, 1
        %s482 = scalar_lea.sflag [#allocation4], %s481
        %s483 = sand.u32 %s261, 1
        %s484 = smul.addr %s483, 8
        %s485 = scalar_lea.vmem [#allocation11], %s484
        %p486 = pneg %p300
        %p487 = pneg %p297
        %p488 = scmp.lt.s32.totalorder %s36, 7
        %s489 = scalar_select %p488, %s36, 7
        %p490 = scmp.lt.s32.totalorder %s35, 0
        %s491 = scalar_select %p490, %s35, 0
        %s492 = sadd.s32 %s491, %s489
        %s493 = smul.addr %s492, 8
        %s494 = scalar_lea.vmem %s1, %s493
        %p495 = scmp.eq.s32.totalorder %s36, 0
        // Predicated region
        $region77: #{tpu_custom_call.1} parent=55 // pred_check
          %p496 = pneg %p495
        $region78: #{tpu_custom_call.1} parent=55 // pred_check_branch
          %498 = sbr.rel (%p496) target = $region80
        $region79: #{tpu_custom_call.1} parent=55 // pred_region
          %v499 = vld [vmem:[#allocation2] sm:$0xff]
          %500 = vst [vmem:[#allocation12] sm:$0xff] %v499
        $region80: #{tpu_custom_call.1} parent=55 // pred_fallthru
          _
        %v501 = vld [vmem:[#allocation12] sm:$0xff]
        %v502 = vpack.c.bf16 %v501, %v501
        %v503 = vld [vmem:[#allocation10] sm:$0xf]
        %v504 = vld [vmem:[#allocation10 + $0x4] sm:$0xf]
        %v505 = vld [vmem:[#allocation10 + $0x8] sm:$0xf]
        %v506 = vld [vmem:[#allocation10 + $0xc] sm:$0xf]
        %v507 = vld [vmem:[#allocation10 + $0x10] sm:$0xf]
        %v508 = vld [vmem:[#allocation10 + $0x14] sm:$0xf]
        %v509 = vld [vmem:[#allocation10 + $0x18] sm:$0xf]
        %v510 = vld [vmem:[#allocation10 + $0x1c] sm:$0xf]
        %v511 = vld [vmem:[#allocation10 + $0x20] sm:$0xf]
        %v512 = vld [vmem:[#allocation10 + $0x24] sm:$0xf]
        %v513 = vld [vmem:[#allocation10 + $0x28] sm:$0xf]
        %v514 = vld [vmem:[#allocation10 + $0x2c] sm:$0xf]
        %v515 = vld [vmem:[#allocation10 + $0x30] sm:$0xf]
        %v516 = vld [vmem:[#allocation10 + $0x34] sm:$0xf]
        %v517 = vld [vmem:[#allocation10 + $0x38] sm:$0xf]
        %v518 = vld [vmem:[#allocation10 + $0x3c] sm:$0xf]
        %v519 = vld [vmem:[%s8] sm:$0x1]
        %v521 = vperm.slane %v519, 0
        %v539 = vunpack.c.l.b16 %v503
        %v540 = vunpack.c.l.b16 %v504
        %v541 = vunpack.c.l.b16 %v505
        %v542 = vunpack.c.l.b16 %v506
        %v543 = vunpack.c.l.b16 %v507
        %v544 = vunpack.c.l.b16 %v508
        %v545 = vunpack.c.l.b16 %v509
        %v546 = vunpack.c.l.b16 %v510
        %v547 = vunpack.c.l.b16 %v511
        %v548 = vunpack.c.l.b16 %v512
        %v549 = vunpack.c.l.b16 %v513
        %v550 = vunpack.c.l.b16 %v514
        %v551 = vunpack.c.l.b16 %v515
        %v552 = vunpack.c.l.b16 %v516
        %v553 = vunpack.c.l.b16 %v517
        %v554 = vunpack.c.l.b16 %v518
        %v555 = vpack.c.b16 %v540, %v539
        %v556 = vpack.c.b16 %v542, %v541
        %v557 = vpack.c.b16 %v544, %v543
        %v558 = vpack.c.b16 %v546, %v545
        %v559 = vpack.c.b16 %v548, %v547
        %v560 = vpack.c.b16 %v550, %v549
        %v561 = vpack.c.b16 %v552, %v551
        %v562 = vpack.c.b16 %v554, %v553
        %571 = vmatpush.bf16.msra.mxu0 %v562
        %572 = vmatpush.bf16.msra.mxu0 %v561
        %573 = vmatpush.bf16.msra.mxu0 %v560
        %574 = vmatpush.bf16.msra.mxu0 %v559
        %575 = vmatpush.bf16.msra.mxu0 %v558
        %576 = vmatpush.bf16.msra.mxu0 %v557
        %577 = vmatpush.bf16.msra.mxu0 %v556
        %578 = vmatpush.bf16.msra.mxu0 %v555
        %579 = vmatmul.bf16.gmra.mxu0 %v502
        %v580 = vpop.f32.mrf.mxu0
        %v581 = vadd.f32 %v521, %v580
        %v582 = vpop.f32.mrf.mxu0
        %583 = vdwg.mxu0
        %584 = vst [vmem:[%s485] sm:$0xff] %v581
        %v585 = vtanh.pop %v501
        %v586 = vpack.c.bf16 %v585, %v585
        %v587 = vld [vmem:[%s3] sm:$0xf]
        %v588 = vld [vmem:[%s3 + $0x4] sm:$0xf]
        %v589 = vld [vmem:[%s3 + $0x8] sm:$0xf]
        %v590 = vld [vmem:[%s3 + $0xc] sm:$0xf]
        %v591 = vld [vmem:[%s3 + $0x10] sm:$0xf]
        %v592 = vld [vmem:[%s3 + $0x14] sm:$0xf]
        %v593 = vld [vmem:[%s3 + $0x18] sm:$0xf]
        %v594 = vld [vmem:[%s3 + $0x1c] sm:$0xf]
        %v595 = vld [vmem:[%s3 + $0x20] sm:$0xf]
        %v596 = vld [vmem:[%s3 + $0x24] sm:$0xf]
        %v597 = vld [vmem:[%s3 + $0x28] sm:$0xf]
        %v598 = vld [vmem:[%s3 + $0x2c] sm:$0xf]
        %v599 = vld [vmem:[%s3 + $0x30] sm:$0xf]
        %v600 = vld [vmem:[%s3 + $0x34] sm:$0xf]
        %v601 = vld [vmem:[%s3 + $0x38] sm:$0xf]
        %v602 = vld [vmem:[%s3 + $0x3c] sm:$0xf]
        %v619 = vunpack.c.l.b16 %v587
        %v620 = vunpack.c.l.b16 %v588
        %v621 = vunpack.c.l.b16 %v589
        %v622 = vunpack.c.l.b16 %v590
        %v623 = vunpack.c.l.b16 %v591
        %v624 = vunpack.c.l.b16 %v592
        %v625 = vunpack.c.l.b16 %v593
        %v626 = vunpack.c.l.b16 %v594
        %v627 = vunpack.c.l.b16 %v595
        %v628 = vunpack.c.l.b16 %v596
        %v629 = vunpack.c.l.b16 %v597
        %v630 = vunpack.c.l.b16 %v598
        %v631 = vunpack.c.l.b16 %v599
        %v632 = vunpack.c.l.b16 %v600
        %v633 = vunpack.c.l.b16 %v601
        %v634 = vunpack.c.l.b16 %v602
        %v635 = vpack.c.b16 %v620, %v619
        %v636 = vpack.c.b16 %v622, %v621
        %v637 = vpack.c.b16 %v624, %v623
        %v638 = vpack.c.b16 %v626, %v625
        %v639 = vpack.c.b16 %v628, %v627
        %v640 = vpack.c.b16 %v630, %v629
        %v641 = vpack.c.b16 %v632, %v631
        %v642 = vpack.c.b16 %v634, %v633
        %651 = vmatpush.bf16.msra.mxu0 %v642
        %652 = vmatpush.bf16.msra.mxu0 %v641
        %653 = vmatpush.bf16.msra.mxu0 %v640
        %654 = vmatpush.bf16.msra.mxu0 %v639
        %655 = vmatpush.bf16.msra.mxu0 %v638
        %656 = vmatpush.bf16.msra.mxu0 %v637
        %657 = vmatpush.bf16.msra.mxu0 %v636
        %658 = vmatpush.bf16.msra.mxu0 %v635
        %659 = vmatmul.bf16.gmra.mxu0 %v586
        %v660 = vpop.f32.mrf.mxu0
        %v661 = vadd.f32 0.0, %v660
        %v662 = vpop.f32.mrf.mxu0
        %663 = vdwg.mxu0
        %v664 = vld [vmem:[#allocation7] sm:$0xf]
        %666 = vset.pattern.permute.xlu0 0
        %667 = vperm.xlu0 %666, %v661
        %v668 = vpop.permute.xlu0 %667
        %v670 = vperm.slane %v664, 0
        %v671 = vmul.f32 %v668, %v670
        %672 = vset.pattern.permute.xlu0 1
        %673 = vperm.xlu0 %672, %v661
        %v674 = vpop.permute.xlu0 %673
        %v676 = vperm.slane %v664, 1
        %v677 = vmul.f32 %v674, %v676
        %v678 = vadd.f32 %v671, %v677
        %679 = vset.pattern.permute.xlu0 2
        %680 = vperm.xlu0 %679, %v661
        %v681 = vpop.permute.xlu0 %680
        %v683 = vperm.slane %v664, 2
        %v684 = vmul.f32 %v681, %v683
        %v685 = vadd.f32 %v678, %v684
        %686 = vset.pattern.permute.xlu0 3
        %687 = vperm.xlu0 %686, %v661
        %v688 = vpop.permute.xlu0 %687
        %v690 = vperm.slane %v664, 3
        %v691 = vmul.f32 %v688, %v690
        %v692 = vadd.f32 %v685, %v691
        %v693 = vld [vmem:[%s494] sm:$0xff]
        %v694 = vpack.c.bf16 %v693, %v693
        %v695 = vld [vmem:[#allocation8] sm:$0xf]
        %v696 = vld [vmem:[#allocation8 + $0x4] sm:$0xf]
        %v697 = vld [vmem:[#allocation8 + $0x8] sm:$0xf]
        %v698 = vld [vmem:[#allocation8 + $0xc] sm:$0xf]
        %v699 = vld [vmem:[#allocation8 + $0x10] sm:$0xf]
        %v700 = vld [vmem:[#allocation8 + $0x14] sm:$0xf]
        %v701 = vld [vmem:[#allocation8 + $0x18] sm:$0xf]
        %v702 = vld [vmem:[#allocation8 + $0x1c] sm:$0xf]
        %v703 = vld [vmem:[#allocation8 + $0x20] sm:$0xf]
        %v704 = vld [vmem:[#allocation8 + $0x24] sm:$0xf]
        %v705 = vld [vmem:[#allocation8 + $0x28] sm:$0xf]
        %v706 = vld [vmem:[#allocation8 + $0x2c] sm:$0xf]
        %v707 = vld [vmem:[#allocation8 + $0x30] sm:$0xf]
        %v708 = vld [vmem:[#allocation8 + $0x34] sm:$0xf]
        %v709 = vld [vmem:[#allocation8 + $0x38] sm:$0xf]
        %v710 = vld [vmem:[#allocation8 + $0x3c] sm:$0xf]
        %v727 = vunpack.c.l.b16 %v695
        %v728 = vunpack.c.l.b16 %v696
        %v729 = vunpack.c.l.b16 %v697
        %v730 = vunpack.c.l.b16 %v698
        %v731 = vunpack.c.l.b16 %v699
        %v732 = vunpack.c.l.b16 %v700
        %v733 = vunpack.c.l.b16 %v701
        %v734 = vunpack.c.l.b16 %v702
        %v735 = vunpack.c.l.b16 %v703
        %v736 = vunpack.c.l.b16 %v704
        %v737 = vunpack.c.l.b16 %v705
        %v738 = vunpack.c.l.b16 %v706
        %v739 = vunpack.c.l.b16 %v707
        %v740 = vunpack.c.l.b16 %v708
        %v741 = vunpack.c.l.b16 %v709
        %v742 = vunpack.c.l.b16 %v710
        %v743 = vpack.c.b16 %v728, %v727
        %v744 = vpack.c.b16 %v730, %v729
        %v745 = vpack.c.b16 %v732, %v731
        %v746 = vpack.c.b16 %v734, %v733
        %v747 = vpack.c.b16 %v736, %v735
        %v748 = vpack.c.b16 %v738, %v737
        %v749 = vpack.c.b16 %v740, %v739
        %v750 = vpack.c.b16 %v742, %v741
        %759 = vmatpush.bf16.msra.mxu0 %v750
        %760 = vmatpush.bf16.msra.mxu0 %v749
        %761 = vmatpush.bf16.msra.mxu0 %v748
        %762 = vmatpush.bf16.msra.mxu0 %v747
        %763 = vmatpush.bf16.msra.mxu0 %v746
        %764 = vmatpush.bf16.msra.mxu0 %v745
        %765 = vmatpush.bf16.msra.mxu0 %v744
        %766 = vmatpush.bf16.msra.mxu0 %v743
        %767 = vmatmul.bf16.gmra.mxu0 %v694
        %v768 = vpop.f32.mrf.mxu0
        %v769 = vadd.f32 0.0, %v768
        %v770 = vpop.f32.mrf.mxu0
        %771 = vdwg.mxu0
        %v772 = vmul.f32 %v501, 0.8
        %v773 = vadd.f32 %v692, %v769
        %v774 = vld [vmem:[%s6] sm:$0x1]
        %v776 = vperm.slane %v774, 0
        %v778 = vadd.f32 %v773, %v776
        %v779 = vld [vmem:[%s428] sm:$0xff]
        %v780 = vadd.f32 %v778, %v779
        %v781 = vmul.f32 %v780, 0.2
        %v782 = vadd.f32 %v772, %v781
        %783 = vst [vmem:[#allocation12] sm:$0xff] %v782
        %s784 = sand.u32 %s261, 1
        %s785 = scalar_lea.sflag [#allocation4], %s784
        %s786 = sand.u32 %s261, 1
        %s787 = smul.addr %s786, 8
        %s788 = scalar_lea.vmem [#allocation11], %s787
        // Predicated region
        $region81: #{tpu_custom_call.1} parent=55 // pred_check
          %p789 = pneg %p271
        $region82: #{tpu_custom_call.1} parent=55 // pred_check_branch
          %791 = sbr.rel (%p789) target = $region84
        $region83: #{tpu_custom_call.1} parent=55 // pred_region
          %793 = vsyncadd %s785, 0
          %s794 = sadd.s32 %s35, %s36
          %s795 = smul.addr %s794, 8
          %s796 = scalar_lea.hbm %s9, %s795
          %s798 = sshll.u32 %s788, 4
          %s799 = int_to_ptr.vmem [resolvable:$true] %s798
          %s800 = sshll.u32 %s796, 4
          %s801 = int_to_ptr.hbm [resolvable:$true] %s800
          %803 = dma.vmem_to_hbm [thread:$0]  %s799, 128, %s801, %s785
        $region84: #{tpu_custom_call.1} parent=55 // pred_fallthru
          _
        // Predicated region
        $region85: #{tpu_custom_call.1} parent=55 // pred_check
          %p804 = pneg %p297
        $region86: #{tpu_custom_call.1} parent=55 // pred_check_branch
          %806 = sbr.rel (%p804) target = $region88
        $region87: #{tpu_custom_call.1} parent=55 // pred_region
          %808 = vsyncadd [#allocation13], 0
          %s809 = smul.addr %s35, 8
          %s810 = scalar_lea.hbm %s10, %s809
          %s812 = sshll.u32 [#allocation12], 4
          %s813 = int_to_ptr.vmem [resolvable:$true] %s812
          %s814 = sshll.u32 %s810, 4
          %s815 = int_to_ptr.hbm [resolvable:$true] %s814
          %817 = dma.vmem_to_hbm [thread:$0]  %s813, 128, %s815, [#allocation13]
        $region88: #{tpu_custom_call.1} parent=55 // pred_fallthru
          _
        // Predicated region
        $region89: #{tpu_custom_call.1} parent=55 // pred_check
          %p818 = pneg %p297
        $region90: #{tpu_custom_call.1} parent=55 // pred_check_branch
          %820 = sbr.rel (%p818) target = $region92
        $region91: #{tpu_custom_call.1} parent=55 // pred_region
          %822 = dma.done [#allocation13], 128
        $region92: #{tpu_custom_call.1} parent=55 // pred_fallthru
          _
      $region56: #{tpu_custom_call.1} parent=5 // pred_fallthru
        _
      %p823 = scmp.le.s32.totalorder 2, %s26
      // Predicated region
      $region93: #{tpu_custom_call.1} parent=5 // pred_check
        %p824 = pneg %p823
      $region94: #{tpu_custom_call.1} parent=5 // pred_check_branch
        %826 = sbr.rel (%p824) target = $region96
      $region95: #{tpu_custom_call.1} parent=5 // pred_region
        %s827 = ssub.s32 %s26, 2
        // Predicated region
        $region97: #{tpu_custom_call.1} parent=95 // pred_check
          %p828 = pneg %p277
        $region98: #{tpu_custom_call.1} parent=95 // pred_check_branch
          %830 = sbr.rel (%p828) target = $region100
        $region99: #{tpu_custom_call.1} parent=95 // pred_region
          %s831 = sand.u32 %s262, 1
          %s832 = scalar_lea.sflag [#allocation4], %s831
          %s833 = sand.u32 %s262, 1
          %s834 = smul.addr %s833, 8
          %s835 = scalar_lea.vmem [#allocation11], %s834
          %837 = dma.done %s832, 128
        $region100: #{tpu_custom_call.1} parent=95 // pred_fallthru
          _
      $region96: #{tpu_custom_call.1} parent=5 // pred_fallthru
        _
    $region6: #{tpu_custom_call.1} parent=1 // loop_footer
      %s30 = sadd.s32 1, %s26
    $region7: #{tpu_custom_call.1} parent=1 // loop_footer_branch
      %25 = sbr.rel target = $region3
    $region8: #{tpu_custom_call.1} parent=1 // loop_exit
      _
    %838 = vsyncpa [#allocation3], 1
    %s839 = scalar_lea.sflag [#allocation3], 1
    %840 = vsyncpa %s839, 1
    %841 = vsyncpa [#allocation6], 1
    %s842 = scalar_lea.sflag [#allocation6], 1
    %843 = vsyncpa %s842, 1
    %844 = vsyncpa [#allocation9], 1
    %845 = vsyncpa [#allocation4], 1
    %s846 = scalar_lea.sflag [#allocation4], 1
    %847 = vsyncpa %s846, 1
    %848 = vsyncpa [#allocation13], 1

</llo_original>
